<compile_context>
chip_gen: v6e
topology: v6e:2x2x1
jax: 0.10.0
libtpu: 0.0.40
codegen_flags: <defaults>
</compile_context>

<pallas_src>
import jax
import jax.numpy as jnp
from jax.experimental import pallas as pl
from jax.experimental.pallas import tpu as pltpu

# Logical (PyTorch) dims.
IN_F = 100    # linear  in_features
HID_F = 200   # linear  out_features / linear2 in_features
OUT_F = 10    # linear2 out_features

# Lane-aligned padded dims used inside the kernel.
HID_P = 256
OUT_P = 128

_NEG = -1e30  # softmax mask value carried by the padded b2 lanes


def _round_up(n, m):
    return (n + m - 1) // m * m


def tiny_kernel(x_ref, w1_ref, b1_ref, w2_ref, b2_ref, o_ref):
    # x:  (TB, 100)  f32  (cast to bf16 here, right before the MXU)
    # w1: (100, 256) bf16, b1: (1, 256) f32
    # w2: (256, 128) bf16, b2: (1, 128) f32 (padded lanes = -1e30)
    x = x_ref[...].astype(jnp.bfloat16)
    h = jnp.dot(x, w1_ref[...],
                preferred_element_type=jnp.float32)            # (TB, 256) f32
    h = jnp.maximum(h + b1_ref[...], 0.0)
    y = jnp.dot(h.astype(jnp.bfloat16), w2_ref[...],
                preferred_element_type=jnp.float32)            # (TB, 128) f32
    y = y + b2_ref[...]              # padded output lanes -> ~-1e30
    y = y - jnp.max(y, axis=-1, keepdims=True)
    e = jnp.exp(y)                   # exp of padded lanes == 0
    denom = jnp.sum(e, axis=-1, keepdims=True)
    # Exact reciprocal: rows sum to 1 at f32 precision. (approx=True would
    # save an EUP op but leaves ~1e-2-level normalization error.)
    inv = pl.reciprocal(denom, approx=False)
    o_ref[...] = (e * inv).astype(o_ref.dtype)


def prepare_params(w1, b1, w2, b2):
    """Pad + cast the weights ONCE at model init; reuse across forwards.

    Weights are in (in_features, out_features) layout (transposed vs.
    PyTorch's Linear.weight) so the kernel computes y = x @ W + b directly.
    """
    w1p = jnp.zeros((IN_F, HID_P), jnp.bfloat16).at[:, :HID_F].set(
        w1.astype(jnp.bfloat16))
    b1p = jnp.zeros((1, HID_P), jnp.float32).at[:, :HID_F].set(
        b1.reshape(1, HID_F).astype(jnp.float32))
    w2p = jnp.zeros((HID_P, OUT_P), jnp.bfloat16).at[:HID_F, :OUT_F].set(
        w2.astype(jnp.bfloat16))
    # Huge negative bias on padded output lanes masks them out of the softmax.
    b2p = jnp.full((1, OUT_P), _NEG, jnp.float32).at[:, :OUT_F].set(
        b2.reshape(1, OUT_F).astype(jnp.float32))
    return w1p, b1p, w2p, b2p


@jax.jit
def tiny_model_forward(x, w1p, b1p, w2p, b2p):
    """softmax(relu(x @ w1 + b1) @ w2 + b2); x: (B, 100) f32 -> (B, 10) f32."""
    B = x.shape[0]
    if B <= 512:
        TB = _round_up(B, 8)
    else:
        # Keep >= 2 parallel grid steps so v7x can shard the batch across its
        # two TensorCores; cap at 512 rows per step (~2 MiB/step in VMEM).
        TB = min(512, _round_up((B + 1) // 2, 8))
    grid = (pl.cdiv(B, TB),)

    out = pl.pallas_call(
        tiny_kernel,
        out_shape=jax.ShapeDtypeStruct((B, OUT_P), jnp.bfloat16),
        grid=grid,
        in_specs=[
            # x fed unpadded (last dim == full array dim); partial final block
            # rows are garbage but row-local and sliced away below.
            pl.BlockSpec((TB, IN_F), lambda i: (i, 0)),
            pl.BlockSpec((IN_F, HID_P), lambda i: (0, 0)),   # resident weights
            pl.BlockSpec((1, HID_P), lambda i: (0, 0)),
            pl.BlockSpec((HID_P, OUT_P), lambda i: (0, 0)),  # resident weights
            pl.BlockSpec((1, OUT_P), lambda i: (0, 0)),
        ],
        out_specs=pl.BlockSpec((TB, OUT_P), lambda i: (i, 0)),
        compiler_params=pltpu.CompilerParams(
            dimension_semantics=("parallel",)),
    )(x, w1p, b1p, w2p, b2p)

    # Slice the logical result out of the lane-dense padded bf16 output.
    return out[:, :OUT_F].astype(jnp.float32)


def reference_forward(x, w1, b1, w2, b2):
    h = jnp.maximum(x @ w1 + b1, 0.0)
    y = h @ w2 + b2
    return jax.nn.softmax(y, axis=1)


if __name__ == "__main__":
    key = jax.random.PRNGKey(0)
    kx, k1, k2, k3, k4 = jax.random.split(key, 5)

    B = 8
    x = jax.random.normal(kx, (B, IN_F), dtype=jnp.float32)

    # PyTorch default Linear init convention: U(-1/sqrt(fan_in), 1/sqrt(fan_in)).
    bnd1 = 1.0 / (IN_F ** 0.5)
    bnd2 = 1.0 / (HID_F ** 0.5)
    w1 = jax.random.uniform(k1, (IN_F, HID_F), jnp.float32, -bnd1, bnd1)
    b1 = jax.random.uniform(k2, (1, HID_F), jnp.float32, -bnd1, bnd1)
    w2 = jax.random.uniform(k3, (HID_F, OUT_F), jnp.float32, -bnd2, bnd2)
    b2 = jax.random.uniform(k4, (1, OUT_F), jnp.float32, -bnd2, bnd2)

    # Pad/cast once ("model init"), reuse for every forward call.
    w1p, b1p, w2p, b2p = prepare_params(w1, b1, w2, b2)

    out = tiny_model_forward(x, w1p, b1p, w2p, b2p)
    out = jax.block_until_ready(out)

    ref = reference_forward(x, w1, b1, w2, b2)
    assert out.shape == (B, OUT_F), out.shape
    # bf16 matmul inputs + bf16 output store: compare against the f32
    # reference with a bf16-sized tolerance (probabilities are in [0, 1]).
    assert jnp.allclose(out, ref, atol=2e-2, rtol=0.0), "mismatch vs reference"
    # Rows sum to 1 up to bf16 output rounding (~2e-3); denominator reciprocal
    # is exact and padded lanes contributed exp(-1e30) == 0.
    assert jnp.allclose(jnp.sum(out, axis=-1), 1.0, atol=1e-2)

    print("KERNEL_OK")
</pallas_src>

<mosaic_0001>
module attributes {stable_mosaic.version = 11 : i64} {
  func.func @tiny_kernel(%arg0: i32, %arg1: memref<8x100xf32, #tpu.memory_space<vmem>>, %arg2: memref<100x256xbf16, #tpu.memory_space<vmem>>, %arg3: memref<1x256xf32, #tpu.memory_space<vmem>>, %arg4: memref<256x128xbf16, #tpu.memory_space<vmem>>, %arg5: memref<1x128xf32, #tpu.memory_space<vmem>>, %arg6: memref<8x128xbf16, #tpu.memory_space<vmem>>) attributes {dimension_semantics = [#tpu.dimension_semantics<parallel>], iteration_bounds = array<i64: 1>, scalar_prefetch = 0 : i64, scratch_operands = 0 : i64, tpu.core_type = #tpu.core_type<tc>, window_params = [{transform_indices = @transform_0, window_bounds = array<i64: 8, 100>}, {pipeline_mode = #tpu.pipeline_mode<synchronous>, transform_indices = @transform_1, window_bounds = array<i64: 100, 256>}, {pipeline_mode = #tpu.pipeline_mode<synchronous>, transform_indices = @transform_2, window_bounds = array<i64: 1, 256>}, {pipeline_mode = #tpu.pipeline_mode<synchronous>, transform_indices = @transform_3, window_bounds = array<i64: 256, 128>}, {pipeline_mode = #tpu.pipeline_mode<synchronous>, transform_indices = @transform_4, window_bounds = array<i64: 1, 128>}, {transform_indices = @transform_5, window_bounds = array<i64: 8, 128>}]} {
    %c0 = arith.constant 0 : index
    %c0_0 = arith.constant 0 : index
    %0 = vector.load %arg1[%c0, %c0_0] : memref<8x100xf32, #tpu.memory_space<vmem>>, vector<8x100xf32>
    %1 = arith.truncf %0 : vector<8x100xf32> to vector<8x100xbf16>
    %c0_1 = arith.constant 0 : index
    %c0_2 = arith.constant 0 : index
    %2 = vector.load %arg2[%c0_1, %c0_2] : memref<100x256xbf16, #tpu.memory_space<vmem>>, vector<100x256xbf16>
    %cst = arith.constant dense<0.000000e+00> : vector<8x256xf32>
    %3 = tpu.matmul %1, %2, %cst {dimension_numbers = #tpu.dot_dimension_numbers<[1], [0], [0], [1], [0, 0, 1, 1], [], []>} : vector<8x100xbf16>, vector<100x256xbf16>, vector<8x256xf32> -> vector<8x256xf32>
    %c0_3 = arith.constant 0 : index
    %c0_4 = arith.constant 0 : index
    %4 = vector.load %arg3[%c0_3, %c0_4] : memref<1x256xf32, #tpu.memory_space<vmem>>, vector<1x256xf32>
    %5 = vector.broadcast %4 : vector<1x256xf32> to vector<8x256xf32>
    %6 = arith.addf %3, %5 : vector<8x256xf32>
    %cst_5 = arith.constant 0.000000e+00 : f32
    %7 = vector.broadcast %cst_5 : f32 to vector<8x256xf32>
    %8 = arith.maximumf %6, %7 : vector<8x256xf32>
    %9 = arith.truncf %8 : vector<8x256xf32> to vector<8x256xbf16>
    %c0_6 = arith.constant 0 : index
    %c0_7 = arith.constant 0 : index
    %10 = vector.load %arg4[%c0_6, %c0_7] : memref<256x128xbf16, #tpu.memory_space<vmem>>, vector<256x128xbf16>
    %cst_8 = arith.constant dense<0.000000e+00> : vector<8x128xf32>
    %11 = tpu.matmul %9, %10, %cst_8 {dimension_numbers = #tpu.dot_dimension_numbers<[1], [0], [0], [1], [0, 0, 1, 1], [], []>} : vector<8x256xbf16>, vector<256x128xbf16>, vector<8x128xf32> -> vector<8x128xf32>
    %c0_9 = arith.constant 0 : index
    %c0_10 = arith.constant 0 : index
    %12 = vector.load %arg5[%c0_9, %c0_10] : memref<1x128xf32, #tpu.memory_space<vmem>>, vector<1x128xf32>
    %13 = vector.broadcast %12 : vector<1x128xf32> to vector<8x128xf32>
    %14 = arith.addf %11, %13 : vector<8x128xf32>
    %cst_11 = arith.constant dense<0xFF800000> : vector<8xf32>
    %15 = vector.multi_reduction <maximumf>, %14, %cst_11 [1] : vector<8x128xf32> to vector<8xf32>
    %16 = vector.shape_cast %15 : vector<8xf32> to vector<8x1xf32>
    %17 = vector.broadcast %16 : vector<8x1xf32> to vector<8x128xf32>
    %18 = arith.subf %14, %17 : vector<8x128xf32>
    %19 = math.exp %18 : vector<8x128xf32>
    %cst_12 = arith.constant dense<0.000000e+00> : vector<8xf32>
    %20 = vector.multi_reduction <add>, %19, %cst_12 [1] : vector<8x128xf32> to vector<8xf32>
    %21 = vector.shape_cast %20 : vector<8xf32> to vector<8x1xf32>
    %22 = tpu.reciprocal %21 : vector<8x1xf32> -> vector<8x1xf32>
    %23 = vector.broadcast %22 : vector<8x1xf32> to vector<8x128xf32>
    %24 = arith.mulf %19, %23 : vector<8x128xf32>
    %25 = arith.truncf %24 : vector<8x128xf32> to vector<8x128xbf16>
    %c0_13 = arith.constant 0 : index
    %c0_14 = arith.constant 0 : index
    %26 = vector.load %arg6[%c0_13, %c0_14] : memref<8x128xbf16, #tpu.memory_space<vmem>>, vector<8x128xbf16>
    tpu.vector_store %arg6[%c0_13, %c0_14], %25 {strides = array<i32>} : memref<8x128xbf16, #tpu.memory_space<vmem>>, vector<8x128xbf16>,
    return
  }
  func.func @transform_0(%arg0: i32) -> (i32, i32) {
    %c0_i32 = arith.constant 0 : i32
    %c0_i32_0 = arith.constant 0 : i32
    return %arg0, %c0_i32 : i32, i32
  }
  func.func @transform_1(%arg0: i32) -> (i32, i32) {
    %c0_i32 = arith.constant 0 : i32
    %c0_i32_0 = arith.constant 0 : i32
    %c0_i32_1 = arith.constant 0 : i32
    return %c0_i32, %c0_i32_0 : i32, i32
  }
  func.func @transform_2(%arg0: i32) -> (i32, i32) {
    %c0_i32 = arith.constant 0 : i32
    %c0_i32_0 = arith.constant 0 : i32
    %c0_i32_1 = arith.constant 0 : i32
    return %c0_i32, %c0_i32_0 : i32, i32
  }
  func.func @transform_3(%arg0: i32) -> (i32, i32) {
    %c0_i32 = arith.constant 0 : i32
    %c0_i32_0 = arith.constant 0 : i32
    %c0_i32_1 = arith.constant 0 : i32
    return %c0_i32, %c0_i32_0 : i32, i32
  }
  func.func @transform_4(%arg0: i32) -> (i32, i32) {
    %c0_i32 = arith.constant 0 : i32
    %c0_i32_0 = arith.constant 0 : i32
    %c0_i32_1 = arith.constant 0 : i32
    return %c0_i32, %c0_i32_0 : i32, i32
  }
  func.func @transform_5(%arg0: i32) -> (i32, i32) {
    %c0_i32 = arith.constant 0 : i32
    %c0_i32_0 = arith.constant 0 : i32
    return %arg0, %c0_i32 : i32, i32
  }
}

</mosaic_0001>

<llo_original>
// kernel: tiny_model_forward.1
$region0: #{tiny_model_forward.1}
  #allocation0 [shape = 'u32[]', space=smem, size = 0x4, offset = 0x4, fixed_abs, tag = 'smem constant byte address 0x4 - core index']
  #allocation1 [shape = 'u32[144,128]{1,0:T(1,128)}', space=vmem, size = 0x12000, scoped, tag = 'internal scratch']
  %s0 = inlined_call_operand.hbm [shape: f32[8,100], index: 0, kind: input, shape index: {}]
  %s1 = inlined_call_operand.hbm [shape: bf16[100,256], index: 1, kind: input, shape index: {}]
  %s2 = inlined_call_operand.vmem [shape: f32[1,256], index: 2, kind: input, shape index: {}]
  %s3 = inlined_call_operand.hbm [shape: bf16[256,128], index: 3, kind: input, shape index: {}]
  %s4 = inlined_call_operand.vmem [shape: f32[1,128], index: 4, kind: input, shape index: {}]
  %s5 = inlined_call_operand.vmem [shape: bf16[8,128], index: 5, kind: output, shape index: {}]
  %s6 = sld [smem:[#allocation0]]
  $region42: #{tiny_model_forward.1} parent=0
    _
  %s8 = ssub.s32 1, %s6
  %s9 = scalar_select 0, %s8, %s6
  $region1: #{tiny_model_forward.1} parent=0
    #allocation2 [shape = 'u8[4096]{0}', space=vmem, size = 0x1000, scoped, tag = 'input window, operand 0, single buffered']
    #allocation3 [shape = 's32[1]{0}', space=sflag, size = 0x4, scoped, tag = 'scoped memory for tiny_model_forward.1']
    #allocation4 [shape = 'u8[53248]{0}', space=vmem, size = 0xd000, scoped, tag = 'input window, operand 1, single buffered']
    #allocation5 [shape = 's32[1]{0}', space=sflag, size = 0x4, scoped, tag = 'scoped memory for tiny_model_forward.1']
    #allocation6 [shape = 'u8[65536]{0}', space=vmem, size = 0x10000, scoped, tag = 'input window, operand 3, single buffered']
    %10 = vsyncpa [#allocation3], 0
    %11 = vsyncpa [#allocation5], 0
    // Predicated region
    $region2: #{tiny_model_forward.1} parent=1 // pred_check
      _
    $region3: #{tiny_model_forward.1} parent=1 // pred_check_branch
      %13 = sbr.rel (0) target = $region5
    $region4: #{tiny_model_forward.1} parent=1 // pred_region
      %s15 = ssub.s32 128, 128
      %16 = vsyncadd [#allocation3], %s15
      %s18 = sshll.u32 [#allocation2], 4
      %s19 = int_to_ptr.vmem [resolvable:$true] %s18
      %21 = dma.hbm_to_vmem [thread:$0]  %s0, 128, %s19, [#allocation3]
    $region5: #{tiny_model_forward.1} parent=1 // pred_fallthru
      _
    // Predicated region
    $region6: #{tiny_model_forward.1} parent=1 // pred_check
      _
    $region7: #{tiny_model_forward.1} parent=1 // pred_check_branch
      %23 = sbr.rel (0) target = $region9
    $region8: #{tiny_model_forward.1} parent=1 // pred_region
      %s25 = ssub.s32 1664, 1664
      %26 = vsyncadd [#allocation5], %s25
      %s27 = sshll.u32 [#allocation4], 4
      %s28 = int_to_ptr.vmem [resolvable:$true] %s27
      %33 = dma.hbm_to_vmem [thread:$0]  %s1, 1664, %s28, [#allocation5], 128, 128, 8
    $region9: #{tiny_model_forward.1} parent=1 // pred_fallthru
      _
    // Predicated region
    $region10: #{tiny_model_forward.1} parent=1 // pred_check
      _
    $region11: #{tiny_model_forward.1} parent=1 // pred_check_branch
      %35 = sbr.rel (0) target = $region13
    $region12: #{tiny_model_forward.1} parent=1 // pred_region
      _
    $region13: #{tiny_model_forward.1} parent=1 // pred_fallthru
      _
    // Predicated region
    $region14: #{tiny_model_forward.1} parent=1 // pred_check
      _
    $region15: #{tiny_model_forward.1} parent=1 // pred_check_branch
      %37 = sbr.rel (0) target = $region17
    $region16: #{tiny_model_forward.1} parent=1 // pred_region
      %s39 = ssub.s32 2048, 2048
      %40 = vsyncadd [#allocation5], %s39
      %s41 = sshll.u32 [#allocation6], 4
      %s42 = int_to_ptr.vmem [resolvable:$true] %s41
      %47 = dma.hbm_to_vmem [thread:$0]  %s3, 2048, %s42, [#allocation5], 64, 64, 4
    $region17: #{tiny_model_forward.1} parent=1 // pred_fallthru
      _
    // Predicated region
    $region18: #{tiny_model_forward.1} parent=1 // pred_check
      _
    $region19: #{tiny_model_forward.1} parent=1 // pred_check_branch
      %49 = sbr.rel (0) target = $region21
    $region20: #{tiny_model_forward.1} parent=1 // pred_region
      _
    $region21: #{tiny_model_forward.1} parent=1 // pred_fallthru
      _
    // Predicated region
    $region22: #{tiny_model_forward.1} parent=1 // pred_check
      _
    $region23: #{tiny_model_forward.1} parent=1 // pred_check_branch
      %51 = sbr.rel (0) target = $region25
    $region24: #{tiny_model_forward.1} parent=1 // pred_region
      %52 = dma.done [#allocation3], 128
    $region25: #{tiny_model_forward.1} parent=1 // pred_fallthru
      _
    // Predicated region
    $region26: #{tiny_model_forward.1} parent=1 // pred_check
      _
    $region27: #{tiny_model_forward.1} parent=1 // pred_check_branch
      %54 = sbr.rel (0) target = $region29
    $region28: #{tiny_model_forward.1} parent=1 // pred_region
      %55 = dma.done [#allocation5], 1664
    $region29: #{tiny_model_forward.1} parent=1 // pred_fallthru
      _
    // Predicated region
    $region30: #{tiny_model_forward.1} parent=1 // pred_check
      _
    $region31: #{tiny_model_forward.1} parent=1 // pred_check_branch
      %57 = sbr.rel (0) target = $region33
    $region32: #{tiny_model_forward.1} parent=1 // pred_region
      %58 = dma.done [#allocation5], 2048
    $region33: #{tiny_model_forward.1} parent=1 // pred_fallthru
      _
    %v60 = vld [vmem:[#allocation2] sm:$0xff]
    %v61 = vpack.c.bf16 %v60, %v60
    %v62 = vld [vmem:[#allocation4] sm:$0xff]
    %v63 = vld [vmem:[#allocation4 + $0x8] sm:$0xff]
    %v64 = vld [vmem:[#allocation4 + $0x10] sm:$0xff]
    %v65 = vld [vmem:[#allocation4 + $0x18] sm:$0xff]
    %v66 = vld [vmem:[#allocation4 + $0x20] sm:$0xff]
    %v67 = vld [vmem:[#allocation4 + $0x28] sm:$0xff]
    %v68 = vld [vmem:[#allocation4 + $0x30] sm:$0xff]
    %v69 = vld [vmem:[#allocation4 + $0x38] sm:$0xff]
    %v70 = vld [vmem:[#allocation4 + $0x40] sm:$0xff]
    %v71 = vld [vmem:[#allocation4 + $0x48] sm:$0xff]
    %v72 = vld [vmem:[#allocation4 + $0x50] sm:$0xff]
    %v73 = vld [vmem:[#allocation4 + $0x58] sm:$0xff]
    %v74 = vld [vmem:[#allocation4 + $0x60] sm:$0x33]
    %v75 = vld [vmem:[%s2] sm:$0x3]
    %v77 = vlaneseq
    %v78 = vshrl.u32 %v77, 7
    %v79 = vsub.s32 0, %v78
    %v80 = vrot.slane %v75, %v79
    %v81 = vlaneseq
    %v82 = vshrl.u32 %v81, 7
    %v83 = vsub.s32 1, %v82
    %v84 = vrot.slane %v75, %v83
    %v100 = vunpack.c.l.b16 %v62
    %v101 = vunpack.c.h.b16 %v62
    %v102 = vunpack.c.l.b16 %v63
    %v103 = vunpack.c.h.b16 %v63
    %v104 = vunpack.c.l.b16 %v64
    %v105 = vunpack.c.h.b16 %v64
    %v106 = vunpack.c.l.b16 %v65
    %v107 = vunpack.c.h.b16 %v65
    %v108 = vunpack.c.l.b16 %v66
    %v109 = vunpack.c.h.b16 %v66
    %v110 = vunpack.c.l.b16 %v67
    %v111 = vunpack.c.h.b16 %v67
    %v112 = vunpack.c.l.b16 %v68
    %v113 = vunpack.c.h.b16 %v68
    %v114 = vunpack.c.l.b16 %v69
    %v115 = vunpack.c.h.b16 %v69
    %v116 = vunpack.c.l.b16 %v70
    %v117 = vunpack.c.h.b16 %v70
    %v118 = vunpack.c.l.b16 %v71
    %v119 = vunpack.c.h.b16 %v71
    %v120 = vunpack.c.l.b16 %v72
    %v121 = vunpack.c.h.b16 %v72
    %v122 = vunpack.c.l.b16 %v73
    %v123 = vunpack.c.h.b16 %v73
    %v124 = vunpack.c.l.b16 %v74
    %v125 = vunpack.c.h.b16 %v74
    %v126 = vpack.c.b16 %v102, %v100
    %v127 = vpack.c.b16 %v103, %v101
    %v128 = vpack.c.b16 %v106, %v104
    %v129 = vpack.c.b16 %v107, %v105
    %v130 = vpack.c.b16 %v110, %v108
    %v131 = vpack.c.b16 %v111, %v109
    %v132 = vpack.c.b16 %v114, %v112
    %v133 = vpack.c.b16 %v115, %v113
    %v134 = vpack.c.b16 %v118, %v116
    %v135 = vpack.c.b16 %v119, %v117
    %v136 = vpack.c.b16 %v122, %v120
    %v137 = vpack.c.b16 %v123, %v121
    %v138 = vpack.c.b16 %v124, %v124
    %v139 = vpack.c.b16 %v125, %v125
    %vm152 = vcmask 818176
    %v154 = vsel %vm152, %v61, 0
    %vm156 = vcmask 1041408
    %v158 = vsel %vm156, %v138, 0
    %v161 = vsel %vm156, %v139, 0
    %163 = vmatprep.subr.bf16.mxu0 0
    %164 = vmatpush1.bf16.msra.mxu0 0
    %165 = vmatprep.subr.bf16.mxu0 %v161
    %166 = vmatpush1.bf16.msra.mxu0 %v158
    %167 = vmatprep.subr.bf16.mxu0 %v137
    %168 = vmatpush1.bf16.msra.mxu0 %v136
    %169 = vmatprep.subr.bf16.mxu0 %v135
    %170 = vmatpush1.bf16.msra.mxu0 %v134
    %171 = vmatprep.subr.bf16.mxu0 %v133
    %172 = vmatpush1.bf16.msra.mxu0 %v132
    %173 = vmatprep.subr.bf16.mxu0 %v131
    %174 = vmatpush1.bf16.msra.mxu0 %v130
    %175 = vmatprep.subr.bf16.mxu0 %v129
    %176 = vmatpush1.bf16.msra.mxu0 %v128
    %177 = vmatprep.subr.bf16.mxu0 %v127
    %178 = vmatpush1.bf16.msra.mxu0 %v126
    %179 = vmatprep.subr.bf16.mxu0 0
    %180 = vmatpush2.bf16.msra.mxu0 0
    %181 = vmatprep.subr.bf16.mxu0 0
    %182 = vmatpush2.bf16.msra.mxu0 0
    %183 = vmatprep.subr.bf16.mxu0 0
    %184 = vmatpush2.bf16.msra.mxu0 0
    %185 = vmatprep.subr.bf16.mxu0 0
    %186 = vmatpush2.bf16.msra.mxu0 0
    %187 = vmatprep.subr.bf16.mxu0 0
    %188 = vmatpush2.bf16.msra.mxu0 0
    %189 = vmatprep.subr.bf16.mxu0 0
    %190 = vmatpush2.bf16.msra.mxu0 0
    %191 = vmatprep.subr.bf16.mxu0 0
    %192 = vmatpush2.bf16.msra.mxu0 0
    %193 = vmatprep.subr.bf16.mxu0 0
    %194 = vmatpush2.bf16.msra.mxu0 0
    %195 = vmatprep.mubr.bf16.mxu0 0
    %196 = vmatmul.mubr.bf16.gmra.mxu0 %v154
    %v197 = vpop.f32.mrf.mxu0
    %v198 = vadd.f32 %v80, %v197
    %v199 = vpop.f32.mrf.mxu0
    %v200 = vadd.f32 %v84, %v199
    %v201 = vpop.f32.mrf.mxu0
    %v202 = vpop.f32.mrf.mxu0
    %203 = vdwg.mxu0
    %v204 = vmax.f32 %v198, 0.0
    %v205 = vmax.f32 %v200, 0.0
    %v206 = vpack.c.bf16 %v204, %v204
    %v207 = vpack.c.bf16 %v205, %v205
    %v208 = vld [vmem:[#allocation6] sm:$0xf]
    %v209 = vld [vmem:[#allocation6 + $0x4] sm:$0xf]
    %v210 = vld [vmem:[#allocation6 + $0x8] sm:$0xf]
    %v211 = vld [vmem:[#allocation6 + $0xc] sm:$0xf]
    %v212 = vld [vmem:[#allocation6 + $0x10] sm:$0xf]
    %v213 = vld [vmem:[#allocation6 + $0x14] sm:$0xf]
    %v214 = vld [vmem:[#allocation6 + $0x18] sm:$0xf]
    %v215 = vld [vmem:[#allocation6 + $0x1c] sm:$0xf]
    %v216 = vld [vmem:[#allocation6 + $0x20] sm:$0xf]
    %v217 = vld [vmem:[#allocation6 + $0x24] sm:$0xf]
    %v218 = vld [vmem:[#allocation6 + $0x28] sm:$0xf]
    %v219 = vld [vmem:[#allocation6 + $0x2c] sm:$0xf]
    %v220 = vld [vmem:[#allocation6 + $0x30] sm:$0xf]
    %v221 = vld [vmem:[#allocation6 + $0x34] sm:$0xf]
    %v222 = vld [vmem:[#allocation6 + $0x38] sm:$0xf]
    %v223 = vld [vmem:[#allocation6 + $0x3c] sm:$0xf]
    %v224 = vld [vmem:[#allocation6 + $0x40] sm:$0xf]
    %v225 = vld [vmem:[#allocation6 + $0x44] sm:$0xf]
    %v226 = vld [vmem:[#allocation6 + $0x48] sm:$0xf]
    %v227 = vld [vmem:[#allocation6 + $0x4c] sm:$0xf]
    %v228 = vld [vmem:[#allocation6 + $0x50] sm:$0xf]
    %v229 = vld [vmem:[#allocation6 + $0x54] sm:$0xf]
    %v230 = vld [vmem:[#allocation6 + $0x58] sm:$0xf]
    %v231 = vld [vmem:[#allocation6 + $0x5c] sm:$0xf]
    %v232 = vld [vmem:[#allocation6 + $0x60] sm:$0xf]
    %v233 = vld [vmem:[#allocation6 + $0x64] sm:$0xf]
    %v234 = vld [vmem:[#allocation6 + $0x68] sm:$0xf]
    %v235 = vld [vmem:[#allocation6 + $0x6c] sm:$0xf]
    %v236 = vld [vmem:[#allocation6 + $0x70] sm:$0xf]
    %v237 = vld [vmem:[#allocation6 + $0x74] sm:$0xf]
    %v238 = vld [vmem:[#allocation6 + $0x78] sm:$0xf]
    %v239 = vld [vmem:[#allocation6 + $0x7c] sm:$0xf]
    %v240 = vld [vmem:[%s4] sm:$0x1]
    %v242 = vlaneseq
    %v243 = vshrl.u32 %v242, 7
    %v244 = vsub.s32 0, %v243
    %v245 = vrot.slane %v240, %v244
    %v279 = vunpack.c.l.b16 %v208
    %v280 = vunpack.c.l.b16 %v209
    %v281 = vunpack.c.l.b16 %v210
    %v282 = vunpack.c.l.b16 %v211
    %v283 = vunpack.c.l.b16 %v212
    %v284 = vunpack.c.l.b16 %v213
    %v285 = vunpack.c.l.b16 %v214
    %v286 = vunpack.c.l.b16 %v215
    %v287 = vunpack.c.l.b16 %v216
    %v288 = vunpack.c.l.b16 %v217
    %v289 = vunpack.c.l.b16 %v218
    %v290 = vunpack.c.l.b16 %v219
    %v291 = vunpack.c.l.b16 %v220
    %v292 = vunpack.c.l.b16 %v221
    %v293 = vunpack.c.l.b16 %v222
    %v294 = vunpack.c.l.b16 %v223
    %v295 = vunpack.c.l.b16 %v224
    %v296 = vunpack.c.l.b16 %v225
    %v297 = vunpack.c.l.b16 %v226
    %v298 = vunpack.c.l.b16 %v227
    %v299 = vunpack.c.l.b16 %v228
    %v300 = vunpack.c.l.b16 %v229
    %v301 = vunpack.c.l.b16 %v230
    %v302 = vunpack.c.l.b16 %v231
    %v303 = vunpack.c.l.b16 %v232
    %v304 = vunpack.c.l.b16 %v233
    %v305 = vunpack.c.l.b16 %v234
    %v306 = vunpack.c.l.b16 %v235
    %v307 = vunpack.c.l.b16 %v236
    %v308 = vunpack.c.l.b16 %v237
    %v309 = vunpack.c.l.b16 %v238
    %v310 = vunpack.c.l.b16 %v239
    %v311 = vpack.c.b16 %v280, %v279
    %v312 = vpack.c.b16 %v282, %v281
    %v313 = vpack.c.b16 %v284, %v283
    %v314 = vpack.c.b16 %v286, %v285
    %v315 = vpack.c.b16 %v288, %v287
    %v316 = vpack.c.b16 %v290, %v289
    %v317 = vpack.c.b16 %v292, %v291
    %v318 = vpack.c.b16 %v294, %v293
    %v319 = vpack.c.b16 %v296, %v295
    %v320 = vpack.c.b16 %v298, %v297
    %v321 = vpack.c.b16 %v300, %v299
    %v322 = vpack.c.b16 %v302, %v301
    %v323 = vpack.c.b16 %v304, %v303
    %v324 = vpack.c.b16 %v306, %v305
    %v325 = vpack.c.b16 %v308, %v307
    %v326 = vpack.c.b16 %v310, %v309
    %343 = vmatprep.subr.bf16.mxu0 0
    %344 = vmatpush1.bf16.msra.mxu0 %v318
    %345 = vmatprep.subr.bf16.mxu0 0
    %346 = vmatpush1.bf16.msra.mxu0 %v317
    %347 = vmatprep.subr.bf16.mxu0 0
    %348 = vmatpush1.bf16.msra.mxu0 %v316
    %349 = vmatprep.subr.bf16.mxu0 0
    %350 = vmatpush1.bf16.msra.mxu0 %v315
    %351 = vmatprep.subr.bf16.mxu0 0
    %352 = vmatpush1.bf16.msra.mxu0 %v314
    %353 = vmatprep.subr.bf16.mxu0 0
    %354 = vmatpush1.bf16.msra.mxu0 %v313
    %355 = vmatprep.subr.bf16.mxu0 0
    %356 = vmatpush1.bf16.msra.mxu0 %v312
    %357 = vmatprep.subr.bf16.mxu0 0
    %358 = vmatpush1.bf16.msra.mxu0 %v311
    %359 = vmatprep.subr.bf16.mxu0 0
    %360 = vmatpush2.bf16.msra.mxu0 %v326
    %361 = vmatprep.subr.bf16.mxu0 0
    %362 = vmatpush2.bf16.msra.mxu0 %v325
    %363 = vmatprep.subr.bf16.mxu0 0
    %364 = vmatpush2.bf16.msra.mxu0 %v324
    %365 = vmatprep.subr.bf16.mxu0 0
    %366 = vmatpush2.bf16.msra.mxu0 %v323
    %367 = vmatprep.subr.bf16.mxu0 0
    %368 = vmatpush2.bf16.msra.mxu0 %v322
    %369 = vmatprep.subr.bf16.mxu0 0
    %370 = vmatpush2.bf16.msra.mxu0 %v321
    %371 = vmatprep.subr.bf16.mxu0 0
    %372 = vmatpush2.bf16.msra.mxu0 %v320
    %373 = vmatprep.subr.bf16.mxu0 0
    %374 = vmatpush2.bf16.msra.mxu0 %v319
    %375 = vmatprep.mubr.bf16.mxu0 %v207
    %376 = vmatmul.mubr.bf16.gmra.mxu0 %v206
    %v377 = vpop.f32.mrf.mxu0
    %v378 = vadd.f32 %v245, %v377
    %v379 = vpop.f32.mrf.mxu0
    %v380 = vpop.f32.mrf.mxu0
    %v381 = vpop.f32.mrf.mxu0
    %382 = vdwg.mxu0
    %383 = vmax.xlane.f32.xlu0 %v378
    %v384 = vpop.xlane.xlu0 %383
    %v385 = vsub.f32 %v378, %v384
    %v386 = vmul.f32 %v385, 1.442695
    %v387 = vpow.pop %v386
    %388 = vadd.xlane.f32.xlu0 %v387
    %v389 = vpop.xlane.xlu0 %388
    %v390 = vrcp.pop %v389
    %v391 = vmul.f32 %v387, %v390
    %v392 = vpack.c.bf16 %v391, %v391
    %393 = vst [vmem:[%s5] sm:$0xf] %v392
    // Predicated region
    $region34: #{tiny_model_forward.1} parent=1 // pred_check
      _
    $region35: #{tiny_model_forward.1} parent=1 // pred_check_branch
      %395 = sbr.rel (0) target = $region37
    $region36: #{tiny_model_forward.1} parent=1 // pred_region
      _
    $region37: #{tiny_model_forward.1} parent=1 // pred_fallthru
      _
    // Predicated region
    $region38: #{tiny_model_forward.1} parent=1 // pred_check
      _
    $region39: #{tiny_model_forward.1} parent=1 // pred_check_branch
      %397 = sbr.rel (0) target = $region41
    $region40: #{tiny_model_forward.1} parent=1 // pred_region
      _
    $region41: #{tiny_model_forward.1} parent=1 // pred_fallthru
      _
    %398 = vsyncpa [#allocation3], 1
    %399 = vsyncpa [#allocation5], 1

</llo_original>
